<compile_context>
chip_gen: v7x
topology: tpu7x:2x2x1
jax: 0.10.0
libtpu: 0.0.40
codegen_flags: <defaults>
</compile_context>

<pallas_src>
import functools

import jax
import jax.numpy as jnp
from jax.experimental import pallas as pl
from jax.experimental.pallas import tpu as pltpu


def _crop_dma_kernel(start_ref, x_hbm, o_ref, sem, *, seq_len):
    """One windowed DMA: HBM rows [start, start+seq_len) -> VMEM output tile."""
    start = start_ref[0]                       # scalar from SMEM (prefetched)
    cp = pltpu.make_async_copy(x_hbm.at[pl.ds(start, seq_len), :], o_ref, sem)
    cp.start()
    cp.wait()


def _crop_batch_dma_kernel(starts_ref, x_hbm, o_ref, sem, *, seq_len):
    """Per-batch-element windowed DMA; grid iterates (or shards) over batch."""
    b = pl.program_id(0)
    start = starts_ref[b]
    cp = pltpu.make_async_copy(x_hbm.at[b, pl.ds(start, seq_len), :], o_ref, sem)
    cp.start()
    cp.wait()


def my_crop(x, seq_len, key):
    """JAX/Pallas equivalent of MyCrop.forward for a single sequence.

    Returns (cropped_or_padded_x, start_idx). The random start index is drawn
    with jax.random (deterministic given `key`) instead of Python's `random`.
    """
    unsqueezed = False
    if x.ndim == 1:
        unsqueezed = True
        x = x[:, None]
    assert x.ndim == 2
    T, C = x.shape

    if T > seq_len:
        # random.randint(min, max) is inclusive -> maxval = T - seq_len + 1
        start = jax.random.randint(key, (1,), 0, T - seq_len + 1, dtype=jnp.int32)
        out_bytes = seq_len * C * x.dtype.itemsize
        out = pl.pallas_call(
            functools.partial(_crop_dma_kernel, seq_len=seq_len),
            out_shape=jax.ShapeDtypeStruct((seq_len, C), x.dtype),
            grid_spec=pltpu.PrefetchScalarGridSpec(
                num_scalar_prefetch=1,                 # `start` -> SMEM
                grid=(1,),
                in_specs=[pl.BlockSpec(memory_space=pl.ANY)],   # x stays in HBM
                out_specs=pl.BlockSpec((seq_len, C), lambda i, s: (0, 0)),
                scratch_shapes=[pltpu.SemaphoreType.DMA],
            ),
            compiler_params=pltpu.CompilerParams(
                dimension_semantics=("arbitrary",),
                # Only the output tile lives in VMEM (double-buffered); bound it
                # explicitly so long sequences never blow v5e/v7x scoped VMEM.
                vmem_limit_bytes=max(4 * out_bytes, 4 * 1024 * 1024),
            ),
        )(start, x)
    elif T < seq_len:
        # Pad / identity gain nothing from Pallas: static shapes, plain XLA.
        start = jnp.zeros((1,), dtype=jnp.int32)
        out = jnp.pad(x, ((0, seq_len - T), (0, 0)))
    else:
        start = jnp.zeros((1,), dtype=jnp.int32)
        out = x

    if unsqueezed:
        out = out[:, 0]
    return out, start[0]


def my_crop_batched(x, seq_len, key):
    """Batched crop of (B, T, C) with independent random starts per sequence.

    Amortizes the fixed pallas_call / per-step overhead across the batch; the
    batch grid axis is "parallel" so v7x shards it over both TensorCores.
    """
    assert x.ndim == 3
    B, T, C = x.shape

    if T <= seq_len:
        starts = jnp.zeros((B,), dtype=jnp.int32)
        out = jnp.pad(x, ((0, 0), (0, seq_len - T), (0, 0))) if T < seq_len else x
        return out, starts

    starts = jax.random.randint(key, (B,), 0, T - seq_len + 1, dtype=jnp.int32)
    out_bytes = seq_len * C * x.dtype.itemsize
    out = pl.pallas_call(
        functools.partial(_crop_batch_dma_kernel, seq_len=seq_len),
        out_shape=jax.ShapeDtypeStruct((B, seq_len, C), x.dtype),
        grid_spec=pltpu.PrefetchScalarGridSpec(
            num_scalar_prefetch=1,                     # `starts` vector -> SMEM
            grid=(B,),
            in_specs=[pl.BlockSpec(memory_space=pl.ANY)],       # x stays in HBM
            out_specs=pl.BlockSpec((None, seq_len, C), lambda b, s: (b, 0, 0)),
            scratch_shapes=[pltpu.SemaphoreType.DMA],
        ),
        compiler_params=pltpu.CompilerParams(
            dimension_semantics=("parallel",),
            vmem_limit_bytes=max(4 * out_bytes, 4 * 1024 * 1024),
        ),
    )(starts, x)
    return out, starts


if __name__ == "__main__":
    key = jax.random.PRNGKey(0)
    k_data1, k_data2, k_data3, k_crop, k_crop_b = jax.random.split(key, 5)
    seq_len = 8

    # Case 1: 2-D input longer than seq_len -> random crop (Pallas windowed DMA).
    x = jax.random.normal(k_data1, (24, 4), dtype=jnp.float32)
    out1, start1 = my_crop(x, seq_len, k_crop)
    out1 = jax.block_until_ready(out1)
    ref1 = jax.lax.dynamic_slice(x, (int(start1), 0), (seq_len, 4))
    assert out1.shape == (seq_len, 4)
    assert jnp.allclose(out1, ref1)

    # Case 2: 1-D input shorter than seq_len -> zero-pad at the end (XLA path).
    y = jax.random.normal(k_data2, (5,), dtype=jnp.float32)
    out2, _ = my_crop(y, seq_len, k_crop)
    out2 = jax.block_until_ready(out2)
    assert out2.shape == (seq_len,)
    assert jnp.allclose(out2[:5], y)
    assert jnp.allclose(out2[5:], 0.0)

    # Case 3: exact length -> identity passthrough (no kernel launch).
    z = jax.random.normal(k_data1, (seq_len, 4), dtype=jnp.float32)
    out3, _ = my_crop(z, seq_len, k_crop)
    out3 = jax.block_until_ready(out3)
    assert jnp.allclose(out3, z)

    # Case 4: 1-D input longer than seq_len -> Pallas crop on (T, 1), squeezed back.
    w = jax.random.normal(k_data3, (32,), dtype=jnp.float32)
    out4, start4 = my_crop(w, seq_len, k_crop)
    out4 = jax.block_until_ready(out4)
    assert out4.shape == (seq_len,)
    assert jnp.allclose(out4, jax.lax.dynamic_slice(w, (int(start4),), (seq_len,)))

    # Case 5: batched crop — amortizes launch overhead, parallel across TCs on v7x.
    xb = jax.random.normal(k_data1, (3, 24, 4), dtype=jnp.float32)
    out5, starts5 = my_crop_batched(xb, seq_len, k_crop_b)
    out5 = jax.block_until_ready(out5)
    assert out5.shape == (3, seq_len, 4)
    for b in range(3):
        refb = jax.lax.dynamic_slice(xb[b], (int(starts5[b]), 0), (seq_len, 4))
        assert jnp.allclose(out5[b], refb)

    print("KERNEL_OK")
</pallas_src>

<mosaic_0001>
module attributes {stable_mosaic.version = 11 : i64} {
  func.func @_crop_dma_kernel(%arg0: i32, %arg1: memref<1xi32, #tpu.memory_space<smem>>, %arg2: memref<24x4xf32, #tpu.memory_space<any>>, %arg3: memref<8x4xf32, #tpu.memory_space<vmem>>, %arg4: memref<!tpu.dma_semaphore, #tpu.memory_space<semaphore_mem>>) attributes {dimension_semantics = [#tpu.dimension_semantics<arbitrary>], iteration_bounds = array<i64: 1>, scalar_prefetch = 1 : i64, scratch_operands = 1 : i64, tpu.core_type = #tpu.core_type<tc>, window_params = [{}, {pipeline_mode = #tpu.pipeline_mode<synchronous>, transform_indices = @transform_1, window_bounds = array<i64: 8, 4>}]} {
    %c0 = arith.constant 0 : index
    %0 = memref.load %arg1[%c0] : memref<1xi32, #tpu.memory_space<smem>>
    %c0_i32 = arith.constant 0 : i32
    %1 = tpu.memref_slice %arg2[%0, %c0_i32] : memref<24x4xf32, #tpu.memory_space<any>> -> memref<8x4xf32, #tpu.memory_space<any>>
    tpu.enqueue_dma source(%1 : memref<8x4xf32, #tpu.memory_space<any>>) target(%arg3 : memref<8x4xf32, #tpu.memory_space<vmem>>) target_semaphore(%arg4 : memref<!tpu.dma_semaphore, #tpu.memory_space<semaphore_mem>>)
    %c0_i32_0 = arith.constant 0 : i32
    %2 = tpu.memref_slice %arg2[%0, %c0_i32_0] : memref<24x4xf32, #tpu.memory_space<any>> -> memref<8x4xf32, #tpu.memory_space<any>>
    tpu.wait_dma2 semaphore(%arg4 : memref<!tpu.dma_semaphore, #tpu.memory_space<semaphore_mem>>) src(%2 : memref<8x4xf32, #tpu.memory_space<any>>) dst(%arg3 : memref<8x4xf32, #tpu.memory_space<vmem>>)
    return
  }
  func.func @transform_1(%arg0: i32, %arg1: memref<1xi32, #tpu.memory_space<smem>>) -> (i32, i32) {
    %c0_i32 = arith.constant 0 : i32
    %c0_i32_0 = arith.constant 0 : i32
    %c0_i32_1 = arith.constant 0 : i32
    return %c0_i32, %c0_i32_0 : i32, i32
  }
}

</mosaic_0001>

<llo_original>
// kernel: tpu_custom_call.1
$region0: #{tpu_custom_call.1}
  #allocation0 [shape = 'u32[]', space=smem, size = 0x4, offset = 0x4, fixed_abs, tag = 'smem constant byte address 0x4 - core index']
  #allocation1 [shape = 'u32[144,128]{1,0:T(1,128)}', space=vmem, size = 0x12000, scoped, tag = 'internal scratch']
  #allocation2 [shape = 's32[1]{0}', space=sflag, size = 0x4, scoped, tag = 'scratch operand']
  #allocation3 [shape = 's32[1]{0}', space=sflag, size = 0x4, scoped, tag = 'scoped memory for tpu_custom_call.1']
  #allocation4 [shape = 's32[1]{0:T(128)S(6)}', space=smem, size = 0x200, scoped, tag = 'prefetched SMEM operand 0']
  #allocation5 [shape = 's32[]', space=sflag, size = 0x4, offset = 0, fixed_abs, tag = 'sflag constant byte address 0x0 - dummy sync flag']
  %s0 = inlined_call_operand.<no memory space> [shape: s32[1], index: 0, kind: input, shape index: {}]
  %s1 = inlined_call_operand.vmem [shape: f32[24,4], index: 1, kind: input, shape index: {}]
  %s2 = inlined_call_operand.vmem [shape: f32[8,4], index: 2, kind: output, shape index: {}]
  %s3 = sld [smem:[#allocation0]]
  $region44: #{tpu_custom_call.1} parent=0
    _
  %s5 = ssub.s32 1, %s3
  %s6 = scalar_select 0, %s5, %s3
  %7 = sst [smem:[#allocation4]] %s0
  %s8 = sld [smem:[#allocation4]]
  %s9 = scalar_lea.vmem %s1, %s8
  %p11 = scmp.lt.u32.totalorder 8, 8
  %p12 = pneg %p11
  // Predicated region
  $region2: #{tpu_custom_call.1} parent=0 // pred_check
    _
  $region3: #{tpu_custom_call.1} parent=0 // pred_check_branch
    %14 = sbr.rel (%p11) target = $region5
  $region4: #{tpu_custom_call.1} parent=0 // pred_region
    %s29 = sand.u32 8, 7
    %p30 = scmp.eq.s32.totalorder %s29, 0
    // Predicated region
    $region17: #{tpu_custom_call.1} parent=4 // pred_check
      %p31 = pneg %p30
    $region18: #{tpu_custom_call.1} parent=4 // pred_check_branch
      %33 = sbr.rel (%p31) target = $region20
    $region19: #{tpu_custom_call.1} parent=4 // pred_region
      loop: start=0, step=1, limit=1
      $region21: #{tpu_custom_call.1} parent=19 // loop_pre_header
        _
      $region22: #{tpu_custom_call.1} parent=19 // loop_header
        %s35 = sphi 0, %s39
        %p36 = scmp.ge.s32.totalorder %s35, 1
        %s40 = sphi %s9, %s9
        %s41 = sphi %s2, %s2
      $region23: #{tpu_custom_call.1} parent=19 // loop_header_branch
        %38 = sbr.rel (%p36) target = $region27
      $region24: #{tpu_custom_call.1} parent=19 // loop_body
        %v42 = vld [vmem:[%s40] sm:$0xff]
        %43 = vst [vmem:[%s41] sm:$0xff] %v42
      $region25: #{tpu_custom_call.1} parent=19 // loop_footer
        %s39 = sadd.s32 1, %s35
      $region26: #{tpu_custom_call.1} parent=19 // loop_footer_branch
        %34 = sbr.rel target = $region22
      $region27: #{tpu_custom_call.1} parent=19 // loop_exit
        _
    $region20: #{tpu_custom_call.1} parent=4 // pred_fallthru
      _
    %p44 = pneg %p30
    // Predicated region
    $region28: #{tpu_custom_call.1} parent=4 // pred_check
      _
    $region29: #{tpu_custom_call.1} parent=4 // pred_check_branch
      %46 = sbr.rel (%p30) target = $region31
    $region30: #{tpu_custom_call.1} parent=4 // pred_region
      %s47 = sand.u32 8, 7
    $region31: #{tpu_custom_call.1} parent=4 // pred_fallthru
      _
  $region5: #{tpu_custom_call.1} parent=0 // pred_fallthru
    _
  // Predicated region
  $region6: #{tpu_custom_call.1} parent=0 // pred_check
    %p15 = pneg %p11
  $region7: #{tpu_custom_call.1} parent=0 // pred_check_branch
    %17 = sbr.rel (%p15) target = $region9
  $region8: #{tpu_custom_call.1} parent=0 // pred_region
    %s18 = sshllo.u32 0, 8
    loop: start=0, step=1, limit=1
    $region10: #{tpu_custom_call.1} parent=8 // loop_pre_header
      _
    $region11: #{tpu_custom_call.1} parent=8 // loop_header
      %s20 = sphi 0, %s24
      %p21 = scmp.ge.s32.totalorder %s20, 1
      %s25 = sphi %s9, %s9
      %s26 = sphi %s2, %s2
    $region12: #{tpu_custom_call.1} parent=8 // loop_header_branch
      %23 = sbr.rel (%p21) target = $region16
    $region13: #{tpu_custom_call.1} parent=8 // loop_body
      %v27 = vld [vmem:[%s25] sm:%s18]
      %28 = vst [vmem:[%s26] sm:%s18] %v27
    $region14: #{tpu_custom_call.1} parent=8 // loop_footer
      %s24 = sadd.s32 1, %s20
    $region15: #{tpu_custom_call.1} parent=8 // loop_footer_branch
      %19 = sbr.rel target = $region11
    $region16: #{tpu_custom_call.1} parent=8 // loop_exit
      _
  $region9: #{tpu_custom_call.1} parent=0 // pred_fallthru
    _
  // Predicated region
  $region32: #{tpu_custom_call.1} parent=0 // pred_check
    _
  $region33: #{tpu_custom_call.1} parent=0 // pred_check_branch
    %50 = sbr.rel (0) target = $region35
  $region34: #{tpu_custom_call.1} parent=0 // pred_region
    %51 = vsyncadd [#allocation2], 128
  $region35: #{tpu_custom_call.1} parent=0 // pred_fallthru
    _
  %s52 = smul.u32 8, 1
  %s53 = sshll.u32 %s52, 4
  %54 = dma.done [#allocation2], %s53
  // Predicated region
  $region36: #{tpu_custom_call.1} parent=0 // pred_check
    _
  $region37: #{tpu_custom_call.1} parent=0 // pred_check_branch
    %56 = sbr.rel (0) target = $region39
  $region38: #{tpu_custom_call.1} parent=0 // pred_region
    _
  $region39: #{tpu_custom_call.1} parent=0 // pred_fallthru
    _
  // Predicated region
  $region40: #{tpu_custom_call.1} parent=0 // pred_check
    _
  $region41: #{tpu_custom_call.1} parent=0 // pred_check_branch
    %58 = sbr.rel (0) target = $region43
  $region42: #{tpu_custom_call.1} parent=0 // pred_region
    _
  $region43: #{tpu_custom_call.1} parent=0 // pred_fallthru
    _
  %59 = vsyncmov [#allocation2]
  %s60 = vpop.sfrf %59
  %p61 = scmp.eq.s32.totalorder %s60, 0
  %p62 = pneg %p61
  %64 = shalt.err (%p62)

</llo_original>
